<compile_context>
chip_gen: v7x
topology: tpu7x:2x2x1
jax: 0.10.0
libtpu: 0.0.40
codegen_flags: <defaults>
</compile_context>

<pallas_src>
import jax
import jax.numpy as jnp
from jax import lax
from jax.experimental import pallas as pl
from jax.experimental.pallas import tpu as pltpu


def _round_up(v, m):
    return ((v + m - 1) // m) * m


def mlp_kernel(x_ref, w1_ref, b1_ref, w2_ref, b2_ref, o_ref):
    # x_ref:  [TB, in]   (natural PyTorch activation layout)
    # w1_ref: [hid, in]  b1_ref: [hid, 1]
    # w2_ref: [out, hid] b2_ref: [out, 1]
    # o_ref:  [out, TB]  (batch on lanes -> lane-dense stores)
    x = x_ref[...]

    # h^T = W1 @ x^T : contract both operands' `in` axes -> [hid, TB].
    # The batch->lanes relayout happens here on the MXU feed, not in HBM.
    h = lax.dot_general(
        w1_ref[...], x,
        dimension_numbers=(((1,), (1,)), ((), ())),
        preferred_element_type=jnp.float32)
    h = h + b1_ref[...].astype(jnp.float32)
    h = jnp.maximum(h, 0.0)  # ReLU in f32 (safe on v5e: no bf16 VALU needed)

    # y^T = W2 @ h^T + b2 -> [out, TB]
    y = jnp.dot(w2_ref[...], h.astype(w2_ref.dtype),
                preferred_element_type=jnp.float32)
    y = y + b2_ref[...].astype(jnp.float32)
    o_ref[...] = y.astype(o_ref.dtype)


def toy_mp_model(x, w1, b1, w2, b2, *, max_batch_tile=8192,
                 transposed_output=False):
    """Forward pass of ToyMpModel.

    x:  [B, 10]   (PyTorch nn.Linear activation layout)
    w1: [10, 10]  (PyTorch weight layout: [out_features, in_features])
    b1: [10]
    w2: [5, 10]
    b2: [5]
    returns [B, 5]  (or [5, B] if transposed_output=True -- zero transposes)
    """
    B, in_dim = x.shape
    hid = w1.shape[0]
    out_dim = w2.shape[0]

    b1c = b1.reshape(hid, 1)       # column biases broadcast over the lane axis
    b2c = b2.reshape(out_dim, 1)

    if B <= 2 * 128:
        # Single full-array block along batch (legal even if B % 128 != 0).
        TB = B
    else:
        # Lane-aligned tile; at least 2 grid steps so v7x's two TensorCores
        # both get work; capped at max_batch_tile to bound VMEM.
        TB = min(_round_up(max_batch_tile, 128),
                 max(128, _round_up(pl.cdiv(B, 2), 128)))
    grid = (pl.cdiv(B, TB),)

    # Scoped-VMEM budget: double-buffered x tile (lane-padded 10 -> 128) and
    # y^T tile (sublane-padded 5 -> 8), plus headroom for weights/compiler.
    itemsize = jnp.dtype(x.dtype).itemsize
    x_tile_bytes = _round_up(TB, 8) * 128 * itemsize
    y_tile_bytes = 8 * _round_up(TB, 128) * itemsize
    vmem_need = 2 * (x_tile_bytes + y_tile_bytes) + (2 << 20)
    vmem_limit = max(vmem_need, 16 << 20)

    yt = pl.pallas_call(
        mlp_kernel,
        out_shape=jax.ShapeDtypeStruct((out_dim, B), x.dtype),
        grid=grid,
        in_specs=[
            pl.BlockSpec((TB, in_dim), lambda i: (i, 0)),     # x tile (natural)
            pl.BlockSpec((hid, in_dim), lambda i: (0, 0)),    # W1 (resident)
            pl.BlockSpec((hid, 1), lambda i: (0, 0)),         # b1 (resident)
            pl.BlockSpec((out_dim, hid), lambda i: (0, 0)),   # W2 (resident)
            pl.BlockSpec((out_dim, 1), lambda i: (0, 0)),     # b2 (resident)
        ],
        out_specs=pl.BlockSpec((out_dim, TB), lambda i: (0, i)),
        compiler_params=pltpu.CompilerParams(
            dimension_semantics=("parallel",),     # megacore / v7x 2-TC split
            vmem_limit_bytes=vmem_limit,
        ),
    )(x, w1, b1c, w2, b2c)

    if transposed_output:
        return yt                  # [5, B]: no wrapper transposes at all
    return yt.T                    # [B, 5]: PyTorch forward semantics


def init_params(key):
    """Deterministic init mimicking torch.nn.Linear default (U(+/- 1/sqrt(fan_in))).
    Weights kept in PyTorch's [out_features, in_features] layout."""
    k1, k2, k3, k4 = jax.random.split(key, 4)
    bound = 1.0 / jnp.sqrt(10.0)
    w1 = jax.random.uniform(k1, (10, 10), jnp.float32, -bound, bound)
    b1 = jax.random.uniform(k2, (10,), jnp.float32, -bound, bound)
    w2 = jax.random.uniform(k3, (5, 10), jnp.float32, -bound, bound)
    b2 = jax.random.uniform(k4, (5,), jnp.float32, -bound, bound)
    return w1, b1, w2, b2


def _reference(x, w1, b1, w2, b2):
    return jnp.maximum(x @ w1.T + b1, 0.0) @ w2.T + b2


if __name__ == "__main__":
    key = jax.random.PRNGKey(0)
    kx, kp = jax.random.split(key)
    w1, b1, w2, b2 = init_params(kp)

    # 1) Small batch -> single full-array block path.
    x_small = jax.random.normal(kx, (8, 10), jnp.float32)
    out_small = jax.block_until_ready(toy_mp_model(x_small, w1, b1, w2, b2))
    assert out_small.shape == (8, 5)
    assert jnp.allclose(out_small, _reference(x_small, w1, b1, w2, b2),
                        atol=1e-5, rtol=1e-5)

    # 2) Larger batch -> tiled grid (TB=256, grid=(2,)) with a ragged tail.
    x_big = jax.random.normal(kx, (384, 10), jnp.float32)
    out_big = jax.block_until_ready(toy_mp_model(x_big, w1, b1, w2, b2))
    assert out_big.shape == (384, 5)
    assert jnp.allclose(out_big, _reference(x_big, w1, b1, w2, b2),
                        atol=1e-5, rtol=1e-5)

    # 3) Zero-transpose output path for layout-aware consumers.
    out_t = jax.block_until_ready(
        toy_mp_model(x_big, w1, b1, w2, b2, transposed_output=True))
    assert out_t.shape == (5, 384)
    assert jnp.allclose(out_t.T, _reference(x_big, w1, b1, w2, b2),
                        atol=1e-5, rtol=1e-5)

    print("KERNEL_OK")
</pallas_src>

<mosaic_0001>
module attributes {stable_mosaic.version = 11 : i64} {
  func.func @mlp_kernel(%arg0: i32, %arg1: memref<8x10xf32, #tpu.memory_space<vmem>>, %arg2: memref<10x10xf32, #tpu.memory_space<vmem>>, %arg3: memref<10x1xf32, #tpu.memory_space<vmem>>, %arg4: memref<5x10xf32, #tpu.memory_space<vmem>>, %arg5: memref<5x1xf32, #tpu.memory_space<vmem>>, %arg6: memref<5x8xf32, #tpu.memory_space<vmem>>) attributes {dimension_semantics = [#tpu.dimension_semantics<parallel>], iteration_bounds = array<i64: 1>, scalar_prefetch = 0 : i64, scratch_operands = 0 : i64, tpu.core_type = #tpu.core_type<tc>, window_params = [{transform_indices = @transform_0, window_bounds = array<i64: 8, 10>}, {pipeline_mode = #tpu.pipeline_mode<synchronous>, transform_indices = @transform_1, window_bounds = array<i64: 10, 10>}, {pipeline_mode = #tpu.pipeline_mode<synchronous>, transform_indices = @transform_2, window_bounds = array<i64: 10, 1>}, {pipeline_mode = #tpu.pipeline_mode<synchronous>, transform_indices = @transform_3, window_bounds = array<i64: 5, 10>}, {pipeline_mode = #tpu.pipeline_mode<synchronous>, transform_indices = @transform_4, window_bounds = array<i64: 5, 1>}, {transform_indices = @transform_5, window_bounds = array<i64: 5, 8>}]} {
    %c0 = arith.constant 0 : index
    %c0_0 = arith.constant 0 : index
    %0 = vector.load %arg1[%c0, %c0_0] : memref<8x10xf32, #tpu.memory_space<vmem>>, vector<8x10xf32>
    %c0_1 = arith.constant 0 : index
    %c0_2 = arith.constant 0 : index
    %1 = vector.load %arg2[%c0_1, %c0_2] : memref<10x10xf32, #tpu.memory_space<vmem>>, vector<10x10xf32>
    %cst = arith.constant dense<0.000000e+00> : vector<10x8xf32>
    %2 = tpu.matmul %1, %0, %cst {dimension_numbers = #tpu.dot_dimension_numbers<[1], [1], [0], [0], [0, 0, 1, 0], [], []>} : vector<10x10xf32>, vector<8x10xf32>, vector<10x8xf32> -> vector<10x8xf32>
    %c0_3 = arith.constant 0 : index
    %c0_4 = arith.constant 0 : index
    %3 = vector.load %arg3[%c0_3, %c0_4] : memref<10x1xf32, #tpu.memory_space<vmem>>, vector<10x1xf32>
    %4 = vector.broadcast %3 : vector<10x1xf32> to vector<10x8xf32>
    %5 = arith.addf %2, %4 : vector<10x8xf32>
    %cst_5 = arith.constant 0.000000e+00 : f32
    %6 = vector.broadcast %cst_5 : f32 to vector<10x8xf32>
    %7 = arith.maximumf %5, %6 : vector<10x8xf32>
    %c0_6 = arith.constant 0 : index
    %c0_7 = arith.constant 0 : index
    %8 = vector.load %arg4[%c0_6, %c0_7] : memref<5x10xf32, #tpu.memory_space<vmem>>, vector<5x10xf32>
    %cst_8 = arith.constant dense<0.000000e+00> : vector<5x8xf32>
    %9 = tpu.matmul %8, %7, %cst_8 {dimension_numbers = #tpu.dot_dimension_numbers<[1], [0], [0], [1], [0, 0, 1, 1], [], []>} : vector<5x10xf32>, vector<10x8xf32>, vector<5x8xf32> -> vector<5x8xf32>
    %c0_9 = arith.constant 0 : index
    %c0_10 = arith.constant 0 : index
    %10 = vector.load %arg5[%c0_9, %c0_10] : memref<5x1xf32, #tpu.memory_space<vmem>>, vector<5x1xf32>
    %11 = vector.broadcast %10 : vector<5x1xf32> to vector<5x8xf32>
    %12 = arith.addf %9, %11 : vector<5x8xf32>
    %c0_11 = arith.constant 0 : index
    %c0_12 = arith.constant 0 : index
    %13 = vector.load %arg6[%c0_11, %c0_12] : memref<5x8xf32, #tpu.memory_space<vmem>>, vector<5x8xf32>
    tpu.vector_store %arg6[%c0_11, %c0_12], %12 {strides = array<i32>} : memref<5x8xf32, #tpu.memory_space<vmem>>, vector<5x8xf32>,
    return
  }
  func.func @transform_0(%arg0: i32) -> (i32, i32) {
    %c0_i32 = arith.constant 0 : i32
    %c0_i32_0 = arith.constant 0 : i32
    return %arg0, %c0_i32 : i32, i32
  }
  func.func @transform_1(%arg0: i32) -> (i32, i32) {
    %c0_i32 = arith.constant 0 : i32
    %c0_i32_0 = arith.constant 0 : i32
    %c0_i32_1 = arith.constant 0 : i32
    return %c0_i32, %c0_i32_0 : i32, i32
  }
  func.func @transform_2(%arg0: i32) -> (i32, i32) {
    %c0_i32 = arith.constant 0 : i32
    %c0_i32_0 = arith.constant 0 : i32
    %c0_i32_1 = arith.constant 0 : i32
    return %c0_i32, %c0_i32_0 : i32, i32
  }
  func.func @transform_3(%arg0: i32) -> (i32, i32) {
    %c0_i32 = arith.constant 0 : i32
    %c0_i32_0 = arith.constant 0 : i32
    %c0_i32_1 = arith.constant 0 : i32
    return %c0_i32, %c0_i32_0 : i32, i32
  }
  func.func @transform_4(%arg0: i32) -> (i32, i32) {
    %c0_i32 = arith.constant 0 : i32
    %c0_i32_0 = arith.constant 0 : i32
    %c0_i32_1 = arith.constant 0 : i32
    return %c0_i32, %c0_i32_0 : i32, i32
  }
  func.func @transform_5(%arg0: i32) -> (i32, i32) {
    %c0_i32 = arith.constant 0 : i32
    %c0_i32_0 = arith.constant 0 : i32
    return %c0_i32, %arg0 : i32, i32
  }
}

</mosaic_0001>

<llo_original>
// kernel: tpu_custom_call.1
$region0: #{tpu_custom_call.1}
  #allocation0 [shape = 'u32[]', space=smem, size = 0x4, offset = 0x4, fixed_abs, tag = 'smem constant byte address 0x4 - core index']
  #allocation1 [shape = 'u32[144,128]{1,0:T(1,128)}', space=vmem, size = 0x12000, scoped, tag = 'internal scratch']
  %s0 = inlined_call_operand.vmem [shape: f32[8,10], index: 0, kind: input, shape index: {}]
  %s1 = inlined_call_operand.vmem [shape: f32[10,10], index: 1, kind: input, shape index: {}]
  %s2 = inlined_call_operand.vmem [shape: f32[10,1], index: 2, kind: input, shape index: {}]
  %s3 = inlined_call_operand.vmem [shape: f32[5,10], index: 3, kind: input, shape index: {}]
  %s4 = inlined_call_operand.vmem [shape: f32[5,1], index: 4, kind: input, shape index: {}]
  %s5 = inlined_call_operand.hbm [shape: f32[5,8], index: 5, kind: output, shape index: {}]
  %s6 = sld [smem:[#allocation0]]
  $region30: #{tpu_custom_call.1} parent=0
    _
  %s8 = ssub.s32 1, %s6
  %s9 = scalar_select 0, %s8, %s6
  $region1: #{tpu_custom_call.1} parent=0
    #allocation2 [shape = 'u8[4096]{0}', space=vmem, size = 0x1000, scoped, tag = 'output window, operand 0, single buffered']
    #allocation3 [shape = 's32[1]{0}', space=sflag, size = 0x4, scoped, tag = 'scoped memory for tpu_custom_call.1']
    %10 = vsyncpa [#allocation3], 0
    // Predicated region
    $region2: #{tpu_custom_call.1} parent=1 // pred_check
      _
    $region3: #{tpu_custom_call.1} parent=1 // pred_check_branch
      %12 = sbr.rel (0) target = $region5
    $region4: #{tpu_custom_call.1} parent=1 // pred_region
      _
    $region5: #{tpu_custom_call.1} parent=1 // pred_fallthru
      _
    // Predicated region
    $region6: #{tpu_custom_call.1} parent=1 // pred_check
      _
    $region7: #{tpu_custom_call.1} parent=1 // pred_check_branch
      %14 = sbr.rel (0) target = $region9
    $region8: #{tpu_custom_call.1} parent=1 // pred_region
      _
    $region9: #{tpu_custom_call.1} parent=1 // pred_fallthru
      _
    // Predicated region
    $region10: #{tpu_custom_call.1} parent=1 // pred_check
      _
    $region11: #{tpu_custom_call.1} parent=1 // pred_check_branch
      %16 = sbr.rel (0) target = $region13
    $region12: #{tpu_custom_call.1} parent=1 // pred_region
      _
    $region13: #{tpu_custom_call.1} parent=1 // pred_fallthru
      _
    // Predicated region
    $region14: #{tpu_custom_call.1} parent=1 // pred_check
      _
    $region15: #{tpu_custom_call.1} parent=1 // pred_check_branch
      %18 = sbr.rel (0) target = $region17
    $region16: #{tpu_custom_call.1} parent=1 // pred_region
      _
    $region17: #{tpu_custom_call.1} parent=1 // pred_fallthru
      _
    // Predicated region
    $region18: #{tpu_custom_call.1} parent=1 // pred_check
      _
    $region19: #{tpu_custom_call.1} parent=1 // pred_check_branch
      %20 = sbr.rel (0) target = $region21
    $region20: #{tpu_custom_call.1} parent=1 // pred_region
      _
    $region21: #{tpu_custom_call.1} parent=1 // pred_fallthru
      _
    %v21 = vld [vmem:[%s0] sm:$0xff]
    %v22 = vld [vmem:[%s1] sm:$0xff]
    %v23 = vld [vmem:[%s1 + $0x8] sm:$0x3]
    %v24 = vld [vmem:[%s2] sm:$0xff]
    %v25 = vld [vmem:[%s2 + $0x8] sm:$0x3]
    %27 = vset.pattern.permute.xlu0 0
    %28 = vperm.xlu0 %27, %v24
    %v29 = vpop.permute.xlu0 %28
    %32 = vset.pattern.permute.xlu0 0
    %33 = vperm.xlu0 %32, %v25
    %v34 = vpop.permute.xlu0 %33
    %vm36 = vcmask 80896
    %v38 = vsel %vm36, %v22, 0
    %v41 = vsel %vm36, %v23, 0
    %v44 = vsel %vm36, %v21, 0
    %46 = vmatprep.subr.mxu0 0.0
    %47 = vmatpush1.xpose.msra.mxu0 %v44
    %48 = vmatprep.subr.mxu0 0.0
    %49 = vmatpush1.xpose.msra.mxu0 0.0
    %50 = vmatprep.subr.mxu0 0.0
    %51 = vmatpush1.xpose.msra.mxu0 0.0
    %52 = vmatprep.subr.mxu0 0.0
    %53 = vmatpush1.xpose.msra.mxu0 0.0
    %54 = vmatprep.subr.mxu0 0.0
    %55 = vmatpush1.xpose.msra.mxu0 0.0
    %56 = vmatprep.subr.mxu0 0.0
    %57 = vmatpush1.xpose.msra.mxu0 0.0
    %58 = vmatprep.subr.mxu0 0.0
    %59 = vmatpush1.xpose.msra.mxu0 0.0
    %60 = vmatprep.subr.mxu0 0.0
    %61 = vmatpush1.xpose.msra.mxu0 0.0
    %62 = vmatprep.subr.mxu0 0.0
    %63 = vmatpush1.xpose.msra.mxu0 0.0
    %64 = vmatprep.subr.mxu0 0.0
    %65 = vmatpush1.xpose.msra.mxu0 0.0
    %66 = vmatprep.subr.mxu0 0.0
    %67 = vmatpush1.xpose.msra.mxu0 0.0
    %68 = vmatprep.subr.mxu0 0.0
    %69 = vmatpush1.xpose.msra.mxu0 0.0
    %70 = vmatprep.subr.mxu0 0.0
    %71 = vmatpush1.xpose.msra.mxu0 0.0
    %72 = vmatprep.subr.mxu0 0.0
    %73 = vmatpush1.xpose.msra.mxu0 0.0
    %74 = vmatprep.subr.mxu0 0.0
    %75 = vmatpush1.xpose.msra.mxu0 0.0
    %76 = vmatprep.subr.mxu0 0.0
    %77 = vmatpush1.xpose.msra.mxu0 0.0
    %78 = vmatprep.subr.mxu0 0.0
    %79 = vmatpush1.xpose.msra.mxu0 0.0
    %80 = vmatprep.subr.mxu0 0.0
    %81 = vmatpush1.xpose.msra.mxu0 0.0
    %82 = vmatprep.subr.mxu0 0.0
    %83 = vmatpush1.xpose.msra.mxu0 0.0
    %84 = vmatprep.subr.mxu0 0.0
    %85 = vmatpush1.xpose.msra.mxu0 0.0
    %86 = vmatprep.subr.mxu0 0.0
    %87 = vmatpush1.xpose.msra.mxu0 0.0
    %88 = vmatprep.subr.mxu0 0.0
    %89 = vmatpush1.xpose.msra.mxu0 0.0
    %90 = vmatprep.subr.mxu0 0.0
    %91 = vmatpush1.xpose.msra.mxu0 0.0
    %92 = vmatprep.subr.mxu0 0.0
    %93 = vmatpush1.xpose.msra.mxu0 0.0
    %94 = vmatprep.subr.mxu0 0.0
    %95 = vmatpush1.xpose.msra.mxu0 0.0
    %96 = vmatprep.subr.mxu0 0.0
    %97 = vmatpush1.xpose.msra.mxu0 0.0
    %98 = vmatprep.subr.mxu0 0.0
    %99 = vmatpush1.xpose.msra.mxu0 0.0
    %100 = vmatprep.subr.mxu0 0.0
    %101 = vmatpush1.xpose.msra.mxu0 0.0
    %102 = vmatprep.subr.mxu0 0.0
    %103 = vmatpush1.xpose.msra.mxu0 0.0
    %104 = vmatprep.subr.mxu0 0.0
    %105 = vmatpush1.xpose.msra.mxu0 0.0
    %106 = vmatprep.subr.mxu0 0.0
    %107 = vmatpush1.xpose.msra.mxu0 0.0
    %108 = vmatprep.subr.mxu0 0.0
    %109 = vmatpush1.xpose.msra.mxu0 0.0
    %110 = vmatprep.mubr.f32.mxu0 0.0
    %111 = vmatmul.mubr.f32.gmra.mrb[0].mxu0 %v38
    %v112 = vpop.f32.mrb[0].mxu0
    %v113 = vadd.f32 %v29, %v112
    %v114 = vpop.f32.mrb[0].mxu0
    %115 = vmatprep.mubr.f32.mxu0 0.0
    %116 = vmatmul.mubr.f32.gmra.mrb[0].mxu0 %v41
    %v117 = vpop.f32.mrb[0].mxu0
    %v118 = vadd.f32 %v34, %v117
    %v119 = vpop.f32.mrb[0].mxu0
    %120 = vdwg.mxu0
    %v121 = vmax.f32 %v113, 0.0
    %v122 = vmax.f32 %v118, 0.0
    %v123 = vld [vmem:[%s3] sm:$0x1f]
    %v124 = vld [vmem:[%s4] sm:$0x1f]
    %126 = vset.pattern.permute.xlu0 0
    %127 = vperm.xlu0 %126, %v124
    %v128 = vpop.permute.xlu0 %127
    %v131 = vsel %vm36, %v123, 0
    %vm133 = vcmask 1041408
    %v135 = vsel %vm133, %v122, 0
    %137 = vmatprep.subr.mxu0 0.0
    %138 = vmatpush1.msra.mxu0 %v121
    %139 = vmatprep.subr.mxu0 0.0
    %140 = vmatpush1.msra.mxu0 %v135
    %141 = vmatprep.subr.mxu0 0.0
    %142 = vmatpush1.msra.mxu0 0.0
    %143 = vmatprep.subr.mxu0 0.0
    %144 = vmatpush1.msra.mxu0 0.0
    %145 = vmatprep.subr.mxu0 0.0
    %146 = vmatpush1.msra.mxu0 0.0
    %147 = vmatprep.subr.mxu0 0.0
    %148 = vmatpush1.msra.mxu0 0.0
    %149 = vmatprep.subr.mxu0 0.0
    %150 = vmatpush1.msra.mxu0 0.0
    %151 = vmatprep.subr.mxu0 0.0
    %152 = vmatpush1.msra.mxu0 0.0
    %153 = vmatprep.subr.mxu0 0.0
    %154 = vmatpush1.msra.mxu0 0.0
    %155 = vmatprep.subr.mxu0 0.0
    %156 = vmatpush1.msra.mxu0 0.0
    %157 = vmatprep.subr.mxu0 0.0
    %158 = vmatpush1.msra.mxu0 0.0
    %159 = vmatprep.subr.mxu0 0.0
    %160 = vmatpush1.msra.mxu0 0.0
    %161 = vmatprep.subr.mxu0 0.0
    %162 = vmatpush1.msra.mxu0 0.0
    %163 = vmatprep.subr.mxu0 0.0
    %164 = vmatpush1.msra.mxu0 0.0
    %165 = vmatprep.subr.mxu0 0.0
    %166 = vmatpush1.msra.mxu0 0.0
    %167 = vmatprep.subr.mxu0 0.0
    %168 = vmatpush1.msra.mxu0 0.0
    %169 = vmatprep.subr.mxu0 0.0
    %170 = vmatpush1.msra.mxu0 0.0
    %171 = vmatprep.subr.mxu0 0.0
    %172 = vmatpush1.msra.mxu0 0.0
    %173 = vmatprep.subr.mxu0 0.0
    %174 = vmatpush1.msra.mxu0 0.0
    %175 = vmatprep.subr.mxu0 0.0
    %176 = vmatpush1.msra.mxu0 0.0
    %177 = vmatprep.subr.mxu0 0.0
    %178 = vmatpush1.msra.mxu0 0.0
    %179 = vmatprep.subr.mxu0 0.0
    %180 = vmatpush1.msra.mxu0 0.0
    %181 = vmatprep.subr.mxu0 0.0
    %182 = vmatpush1.msra.mxu0 0.0
    %183 = vmatprep.subr.mxu0 0.0
    %184 = vmatpush1.msra.mxu0 0.0
    %185 = vmatprep.subr.mxu0 0.0
    %186 = vmatpush1.msra.mxu0 0.0
    %187 = vmatprep.subr.mxu0 0.0
    %188 = vmatpush1.msra.mxu0 0.0
    %189 = vmatprep.subr.mxu0 0.0
    %190 = vmatpush1.msra.mxu0 0.0
    %191 = vmatprep.subr.mxu0 0.0
    %192 = vmatpush1.msra.mxu0 0.0
    %193 = vmatprep.subr.mxu0 0.0
    %194 = vmatpush1.msra.mxu0 0.0
    %195 = vmatprep.subr.mxu0 0.0
    %196 = vmatpush1.msra.mxu0 0.0
    %197 = vmatprep.subr.mxu0 0.0
    %198 = vmatpush1.msra.mxu0 0.0
    %199 = vmatprep.subr.mxu0 0.0
    %200 = vmatpush1.msra.mxu0 0.0
    %201 = vmatprep.mubr.f32.mxu0 0.0
    %202 = vmatmul.mubr.f32.gmra.mrb[0].mxu0 %v131
    %v203 = vpop.f32.mrb[0].mxu0
    %v204 = vadd.f32 %v128, %v203
    %v205 = vpop.f32.mrb[0].mxu0
    %206 = vdwg.mxu0
    %vm207 = vcmask 61440
    %208 = vst.msk [vmem:[#allocation2] sm:$0x1f] %vm207, %v204
    // Predicated region
    $region22: #{tpu_custom_call.1} parent=1 // pred_check
      _
    $region23: #{tpu_custom_call.1} parent=1 // pred_check_branch
      %210 = sbr.rel (0) target = $region25
    $region24: #{tpu_custom_call.1} parent=1 // pred_region
      %s212 = ssub.s32 128, 128
      %213 = vsyncadd [#allocation3], %s212
      %s215 = sshll.u32 [#allocation2], 4
      %s216 = int_to_ptr.vmem [resolvable:$true] %s215
      %218 = dma.vmem_to_hbm [thread:$0]  %s216, 128, %s5, [#allocation3]
    $region25: #{tpu_custom_call.1} parent=1 // pred_fallthru
      _
    // Predicated region
    $region26: #{tpu_custom_call.1} parent=1 // pred_check
      _
    $region27: #{tpu_custom_call.1} parent=1 // pred_check_branch
      %220 = sbr.rel (0) target = $region29
    $region28: #{tpu_custom_call.1} parent=1 // pred_region
      %221 = dma.done [#allocation3], 128
    $region29: #{tpu_custom_call.1} parent=1 // pred_fallthru
      _
    %222 = vsyncpa [#allocation3], 1

</llo_original>
